<compile_context>
chip_gen: v7x
topology: tpu7x:2x2x1
jax: 0.10.0
libtpu: 0.0.40
codegen_flags: <defaults>
</compile_context>

<pallas_src>
import jax
import jax.numpy as jnp
from jax.experimental import pallas as pl
from jax.experimental.pallas import tpu as pltpu

_LANE = 128


def _round_up(n, m):
    return ((n + m - 1) // m) * m


def _mlp_kernel(x_ref, w1_ref, b1_ref, w2_ref, b2_ref, w3_ref, b3_ref, o_ref):
    # One batch tile per grid step; weights/biases are resident across steps.
    # All matmuls accumulate in f32 on the MXU; ReLU runs in f32 on the VPU.
    x = x_ref[...]
    h1 = jnp.dot(x, w1_ref[...], preferred_element_type=jnp.float32) + b1_ref[...]
    h1 = jnp.maximum(h1, 0.0)
    h2 = jnp.dot(h1.astype(w2_ref.dtype), w2_ref[...],
                 preferred_element_type=jnp.float32) + b2_ref[...]
    h2 = jnp.maximum(h2, 0.0)
    logits = jnp.dot(h2.astype(w3_ref.dtype), w3_ref[...],
                     preferred_element_type=jnp.float32) + b3_ref[...]
    o_ref[...] = logits.astype(o_ref.dtype)


def init_params(key, state_dim, action_dim, hidden_size=64):
    """Deterministic init mimicking nn.Linear's U(-1/sqrt(fan_in), 1/sqrt(fan_in)).

    Weights are stored [in_features, out_features] (transposed from PyTorch) so the
    kernel computes x @ W + b directly on the MXU.
    """
    ks = jax.random.split(key, 6)

    def linear(kw, kb, fan_in, fan_out):
        bound = 1.0 / jnp.sqrt(jnp.float32(fan_in))
        w = jax.random.uniform(kw, (fan_in, fan_out), jnp.float32, -bound, bound)
        b = jax.random.uniform(kb, (1, fan_out), jnp.float32, -bound, bound)
        return w, b

    w1, b1 = linear(ks[0], ks[1], state_dim, hidden_size)
    w2, b2 = linear(ks[2], ks[3], hidden_size, hidden_size)
    w3, b3 = linear(ks[4], ks[5], hidden_size, action_dim)
    return {"w1": w1, "b1": b1, "w2": w2, "b2": b2, "w3": w3, "b3": b3}


def prepare_padded_params(params, compute_dtype=jnp.bfloat16):
    """One-time padding: only the *hidden* dim is padded to a lane multiple (128).

    state_dim (input cols of x / rows of w1) and action_dim (output cols) are left
    unpadded -- their blocks use the full-array-dim exception, so no HBM traffic is
    wasted on padding.  Zero-padded hidden rows/cols are numerically inert.
    Weights are cast to compute_dtype (bf16 recommended on v6e/v7x); biases stay f32.
    """
    w1, b1 = params["w1"], params["b1"]
    w2, b2 = params["w2"], params["b2"]
    w3, b3 = params["w3"], params["b3"]
    state_dim, hidden = w1.shape
    action_dim = w3.shape[1]
    hp = _round_up(hidden, _LANE)
    dh = hp - hidden
    padded = {
        "w1": jnp.pad(w1, ((0, 0), (0, dh))).astype(compute_dtype),
        "b1": jnp.pad(b1, ((0, 0), (0, dh))).astype(jnp.float32),
        "w2": jnp.pad(w2, ((0, dh), (0, dh))).astype(compute_dtype),
        "b2": jnp.pad(b2, ((0, 0), (0, dh))).astype(jnp.float32),
        "w3": jnp.pad(w3, ((0, dh), (0, 0))).astype(compute_dtype),
        "b3": b3.astype(jnp.float32),
    }
    dims = {"state_dim": state_dim, "hidden": hidden, "action_dim": action_dim,
            "h_pad": hp}
    return padded, dims


def policy_network_forward(x, padded_params, dims, *, tb_max=1024,
                           min_kernel_batch=128, allow_fallback=True):
    """x: [B, state_dim] (any float dtype). Returns f32 logits [B, action_dim]."""
    B, state_dim = x.shape
    assert state_dim == dims["state_dim"]
    hp = dims["h_pad"]
    action_dim = dims["action_dim"]

    w1, b1 = padded_params["w1"], padded_params["b1"]
    w2, b2 = padded_params["w2"], padded_params["b2"]
    w3, b3 = padded_params["w3"], padded_params["b3"]
    compute_dtype = w1.dtype

    if allow_fallback and B < min_kernel_batch:
        # Small-batch fallback: pallas_call fixed cost + wrapper passes dominate at
        # tiny B; plain XLA ops are strictly cheaper and numerically identical.
        xc = x.astype(compute_dtype)
        h1 = jnp.maximum(
            jnp.dot(xc, w1, preferred_element_type=jnp.float32) + b1, 0.0)
        h2 = jnp.maximum(
            jnp.dot(h1.astype(compute_dtype), w2,
                    preferred_element_type=jnp.float32) + b2, 0.0)
        return (jnp.dot(h2.astype(compute_dtype), w3,
                        preferred_element_type=jnp.float32) + b3)[:, :action_dim]

    # Batch-tile selection: multiple of 16 rows for bf16 (8 for f32), capped at tb_max,
    # and chosen so there are >= 2 grid steps whenever B allows it (keeps both v7x
    # TensorCores busy via the "parallel" batch axis).
    row_align = 16 if compute_dtype == jnp.bfloat16 else 8
    if B >= 2 * row_align:
        tb = min(tb_max, _round_up(pl.cdiv(B, 2), row_align))
    else:
        tb = _round_up(max(B, 1), row_align)
    b_pad = _round_up(B, tb)
    grid = (b_pad // tb,)

    # Only batch padding (zero rows are sliced off at the end); feature dim untouched.
    x_p = x.astype(compute_dtype)
    if b_pad != B:
        x_p = jnp.pad(x_p, ((0, b_pad - B), (0, 0)))

    def resident(shape):
        # Constant index_map -> DMA'd once, stays VMEM-resident across grid steps.
        return pl.BlockSpec(shape, lambda i: (0, 0))

    c_item = jnp.dtype(compute_dtype).itemsize
    cost = pl.CostEstimate(
        flops=2 * b_pad * (state_dim * hp + hp * hp + hp * action_dim),
        transcendentals=0,
        bytes_accessed=(b_pad * state_dim + w1.size + w2.size + w3.size) * c_item
        + (b1.size + b2.size + b3.size + b_pad * action_dim) * 4,
    )

    out = pl.pallas_call(
        _mlp_kernel,
        out_shape=jax.ShapeDtypeStruct((b_pad, action_dim), jnp.float32),
        grid=grid,
        in_specs=[
            # x: tiled over batch; last block dim == full array dim (no lane padding).
            pl.BlockSpec((tb, state_dim), lambda i: (i, 0)),
            resident((state_dim, hp)), resident((1, hp)),        # w1, b1
            resident((hp, hp)), resident((1, hp)),               # w2, b2
            resident((hp, action_dim)), resident((1, action_dim)),  # w3, b3
        ],
        # Unpadded output columns: masked stores, but ~32x less HBM writeback.
        out_specs=pl.BlockSpec((tb, action_dim), lambda i: (i, 0)),
        compiler_params=pltpu.CompilerParams(
            dimension_semantics=("parallel",),
        ),
        cost_estimate=cost,
    )(x_p, w1, b1, w2, b2, w3, b3)

    return out[:B] if b_pad != B else out


def _reference_forward(x, p):
    h1 = jnp.maximum(x @ p["w1"] + p["b1"], 0.0)
    h2 = jnp.maximum(h1 @ p["w2"] + p["b2"], 0.0)
    return h2 @ p["w3"] + p["b3"]


if __name__ == "__main__":
    key = jax.random.PRNGKey(0)
    k_params, k_x, k_big = jax.random.split(key, 3)

    batch, state_dim, action_dim, hidden_size = 2, 8, 4, 64
    params = init_params(k_params, state_dim, action_dim, hidden_size)

    # ----- f32 compute path: bit-level parity with the reference -----
    padded_f32, dims = prepare_padded_params(params, compute_dtype=jnp.float32)

    x = jax.random.normal(k_x, (batch, state_dim), jnp.float32)
    ref = _reference_forward(x, params)

    # Tiny batch, kernel forced (single grid step).
    logits = policy_network_forward(x, padded_f32, dims, allow_fallback=False)
    jax.block_until_ready(logits)
    assert logits.shape == (batch, action_dim)
    assert jnp.allclose(logits, ref, atol=1e-5, rtol=1e-5)

    # Tiny batch, small-batch fallback path.
    logits_fb = policy_network_forward(x, padded_f32, dims)
    jax.block_until_ready(logits_fb)
    assert logits_fb.shape == (batch, action_dim)
    assert jnp.allclose(logits_fb, ref, atol=1e-5, rtol=1e-5)

    # Larger, non-multiple batch: exercises batch tiling (>=2 grid steps) + batch padding.
    big_b = 1000
    x_big = jax.random.normal(k_big, (big_b, state_dim), jnp.float32)
    ref_big = _reference_forward(x_big, params)

    logits_big = policy_network_forward(x_big, padded_f32, dims)
    jax.block_until_ready(logits_big)
    assert logits_big.shape == (big_b, action_dim)
    assert jnp.allclose(logits_big, ref_big, atol=1e-4, rtol=1e-4)

    # ----- bf16 compute path (recommended default on v6e/v7x): f32 accumulation -----
    padded_bf16, dims_bf16 = prepare_padded_params(params, compute_dtype=jnp.bfloat16)
    logits_bf16 = policy_network_forward(x_big, padded_bf16, dims_bf16)
    jax.block_until_ready(logits_bf16)
    assert logits_bf16.shape == (big_b, action_dim)
    assert jnp.allclose(logits_bf16, ref_big, atol=5e-2, rtol=5e-2)

    # TODO(synk): get_action_and_logp (softmax + Categorical sampling) is a host-side
    # utility around forward(); not implemented as a kernel.
    print("KERNEL_OK")
</pallas_src>

<mosaic_0001>
module attributes {stable_mosaic.version = 11 : i64} {
  func.func @_mlp_kernel(%arg0: i32, %arg1: memref<8x8xf32, #tpu.memory_space<vmem>>, %arg2: memref<8x128xf32, #tpu.memory_space<vmem>>, %arg3: memref<1x128xf32, #tpu.memory_space<vmem>>, %arg4: memref<128x128xf32, #tpu.memory_space<vmem>>, %arg5: memref<1x128xf32, #tpu.memory_space<vmem>>, %arg6: memref<128x4xf32, #tpu.memory_space<vmem>>, %arg7: memref<1x4xf32, #tpu.memory_space<vmem>>, %arg8: memref<8x4xf32, #tpu.memory_space<vmem>>) attributes {dimension_semantics = [#tpu.dimension_semantics<parallel>], iteration_bounds = array<i64: 1>, scalar_prefetch = 0 : i64, scratch_operands = 0 : i64, tpu.core_type = #tpu.core_type<tc>, window_params = [{transform_indices = @transform_0, window_bounds = array<i64: 8, 8>}, {pipeline_mode = #tpu.pipeline_mode<synchronous>, transform_indices = @transform_1, window_bounds = array<i64: 8, 128>}, {pipeline_mode = #tpu.pipeline_mode<synchronous>, transform_indices = @transform_2, window_bounds = array<i64: 1, 128>}, {pipeline_mode = #tpu.pipeline_mode<synchronous>, transform_indices = @transform_3, window_bounds = array<i64: 128, 128>}, {pipeline_mode = #tpu.pipeline_mode<synchronous>, transform_indices = @transform_4, window_bounds = array<i64: 1, 128>}, {pipeline_mode = #tpu.pipeline_mode<synchronous>, transform_indices = @transform_5, window_bounds = array<i64: 128, 4>}, {pipeline_mode = #tpu.pipeline_mode<synchronous>, transform_indices = @transform_6, window_bounds = array<i64: 1, 4>}, {transform_indices = @transform_7, window_bounds = array<i64: 8, 4>}]} {
    %c0 = arith.constant 0 : index
    %c0_0 = arith.constant 0 : index
    %0 = vector.load %arg1[%c0, %c0_0] : memref<8x8xf32, #tpu.memory_space<vmem>>, vector<8x8xf32>
    %c0_1 = arith.constant 0 : index
    %c0_2 = arith.constant 0 : index
    %1 = vector.load %arg2[%c0_1, %c0_2] : memref<8x128xf32, #tpu.memory_space<vmem>>, vector<8x128xf32>
    %cst = arith.constant dense<0.000000e+00> : vector<8x128xf32>
    %2 = tpu.matmul %0, %1, %cst {dimension_numbers = #tpu.dot_dimension_numbers<[1], [0], [0], [1], [0, 0, 1, 1], [], []>} : vector<8x8xf32>, vector<8x128xf32>, vector<8x128xf32> -> vector<8x128xf32>
    %c0_3 = arith.constant 0 : index
    %c0_4 = arith.constant 0 : index
    %3 = vector.load %arg3[%c0_3, %c0_4] : memref<1x128xf32, #tpu.memory_space<vmem>>, vector<1x128xf32>
    %4 = vector.broadcast %3 : vector<1x128xf32> to vector<8x128xf32>
    %5 = arith.addf %2, %4 : vector<8x128xf32>
    %cst_5 = arith.constant 0.000000e+00 : f32
    %6 = vector.broadcast %cst_5 : f32 to vector<8x128xf32>
    %7 = arith.maximumf %5, %6 : vector<8x128xf32>
    %c0_6 = arith.constant 0 : index
    %c0_7 = arith.constant 0 : index
    %8 = vector.load %arg4[%c0_6, %c0_7] : memref<128x128xf32, #tpu.memory_space<vmem>>, vector<128x128xf32>
    %cst_8 = arith.constant dense<0.000000e+00> : vector<8x128xf32>
    %9 = tpu.matmul %7, %8, %cst_8 {dimension_numbers = #tpu.dot_dimension_numbers<[1], [0], [0], [1], [0, 0, 1, 1], [], []>} : vector<8x128xf32>, vector<128x128xf32>, vector<8x128xf32> -> vector<8x128xf32>
    %c0_9 = arith.constant 0 : index
    %c0_10 = arith.constant 0 : index
    %10 = vector.load %arg5[%c0_9, %c0_10] : memref<1x128xf32, #tpu.memory_space<vmem>>, vector<1x128xf32>
    %11 = vector.broadcast %10 : vector<1x128xf32> to vector<8x128xf32>
    %12 = arith.addf %9, %11 : vector<8x128xf32>
    %cst_11 = arith.constant 0.000000e+00 : f32
    %13 = vector.broadcast %cst_11 : f32 to vector<8x128xf32>
    %14 = arith.maximumf %12, %13 : vector<8x128xf32>
    %c0_12 = arith.constant 0 : index
    %c0_13 = arith.constant 0 : index
    %15 = vector.load %arg6[%c0_12, %c0_13] : memref<128x4xf32, #tpu.memory_space<vmem>>, vector<128x4xf32>
    %cst_14 = arith.constant dense<0.000000e+00> : vector<8x4xf32>
    %16 = tpu.matmul %14, %15, %cst_14 {dimension_numbers = #tpu.dot_dimension_numbers<[1], [0], [0], [1], [0, 0, 1, 1], [], []>} : vector<8x128xf32>, vector<128x4xf32>, vector<8x4xf32> -> vector<8x4xf32>
    %c0_15 = arith.constant 0 : index
    %c0_16 = arith.constant 0 : index
    %17 = vector.load %arg7[%c0_15, %c0_16] : memref<1x4xf32, #tpu.memory_space<vmem>>, vector<1x4xf32>
    %18 = vector.broadcast %17 : vector<1x4xf32> to vector<8x4xf32>
    %19 = arith.addf %16, %18 : vector<8x4xf32>
    %c0_17 = arith.constant 0 : index
    %c0_18 = arith.constant 0 : index
    %20 = vector.load %arg8[%c0_17, %c0_18] : memref<8x4xf32, #tpu.memory_space<vmem>>, vector<8x4xf32>
    tpu.vector_store %arg8[%c0_17, %c0_18], %19 {strides = array<i32>} : memref<8x4xf32, #tpu.memory_space<vmem>>, vector<8x4xf32>,
    return
  }
  func.func @transform_0(%arg0: i32) -> (i32, i32) {
    %c0_i32 = arith.constant 0 : i32
    %c0_i32_0 = arith.constant 0 : i32
    return %arg0, %c0_i32 : i32, i32
  }
  func.func @transform_1(%arg0: i32) -> (i32, i32) {
    %c0_i32 = arith.constant 0 : i32
    %c0_i32_0 = arith.constant 0 : i32
    %c0_i32_1 = arith.constant 0 : i32
    return %c0_i32, %c0_i32_0 : i32, i32
  }
  func.func @transform_2(%arg0: i32) -> (i32, i32) {
    %c0_i32 = arith.constant 0 : i32
    %c0_i32_0 = arith.constant 0 : i32
    %c0_i32_1 = arith.constant 0 : i32
    return %c0_i32, %c0_i32_0 : i32, i32
  }
  func.func @transform_3(%arg0: i32) -> (i32, i32) {
    %c0_i32 = arith.constant 0 : i32
    %c0_i32_0 = arith.constant 0 : i32
    %c0_i32_1 = arith.constant 0 : i32
    return %c0_i32, %c0_i32_0 : i32, i32
  }
  func.func @transform_4(%arg0: i32) -> (i32, i32) {
    %c0_i32 = arith.constant 0 : i32
    %c0_i32_0 = arith.constant 0 : i32
    %c0_i32_1 = arith.constant 0 : i32
    return %c0_i32, %c0_i32_0 : i32, i32
  }
  func.func @transform_5(%arg0: i32) -> (i32, i32) {
    %c0_i32 = arith.constant 0 : i32
    %c0_i32_0 = arith.constant 0 : i32
    %c0_i32_1 = arith.constant 0 : i32
    return %c0_i32, %c0_i32_0 : i32, i32
  }
  func.func @transform_6(%arg0: i32) -> (i32, i32) {
    %c0_i32 = arith.constant 0 : i32
    %c0_i32_0 = arith.constant 0 : i32
    %c0_i32_1 = arith.constant 0 : i32
    return %c0_i32, %c0_i32_0 : i32, i32
  }
  func.func @transform_7(%arg0: i32) -> (i32, i32) {
    %c0_i32 = arith.constant 0 : i32
    %c0_i32_0 = arith.constant 0 : i32
    return %arg0, %c0_i32 : i32, i32
  }
}

</mosaic_0001>

<llo_original>
// kernel: tpu_custom_call.1
$region0: #{tpu_custom_call.1}
  #allocation0 [shape = 'u32[]', space=smem, size = 0x4, offset = 0x4, fixed_abs, tag = 'smem constant byte address 0x4 - core index']
  #allocation1 [shape = 'u32[144,128]{1,0:T(1,128)}', space=vmem, size = 0x12000, scoped, tag = 'internal scratch']
  %s0 = inlined_call_operand.vmem [shape: f32[8,8], index: 0, kind: input, shape index: {}]
  %s1 = inlined_call_operand.hbm [shape: f32[8,128], index: 1, kind: input, shape index: {}]
  %s2 = inlined_call_operand.vmem [shape: f32[1,128], index: 2, kind: input, shape index: {}]
  %s3 = inlined_call_operand.vmem [shape: f32[128,128], index: 3, kind: input, shape index: {}]
  %s4 = inlined_call_operand.vmem [shape: f32[1,128], index: 4, kind: input, shape index: {}]
  %s5 = inlined_call_operand.vmem [shape: f32[128,4], index: 5, kind: input, shape index: {}]
  %s6 = inlined_call_operand.vmem [shape: f32[1,4], index: 6, kind: input, shape index: {}]
  %s7 = inlined_call_operand.vmem [shape: f32[8,4], index: 7, kind: output, shape index: {}]
  %s8 = sld [smem:[#allocation0]]
  $region42: #{tpu_custom_call.1} parent=0
    _
  %s10 = ssub.s32 1, %s8
  %s11 = scalar_select 0, %s10, %s8
  $region1: #{tpu_custom_call.1} parent=0
    #allocation2 [shape = 'u8[4096]{0}', space=vmem, size = 0x1000, scoped, tag = 'input window, operand 1, single buffered']
    #allocation3 [shape = 's32[1]{0}', space=sflag, size = 0x4, scoped, tag = 'scoped memory for tpu_custom_call.1']
    %12 = vsyncpa [#allocation3], 0
    // Predicated region
    $region2: #{tpu_custom_call.1} parent=1 // pred_check
      _
    $region3: #{tpu_custom_call.1} parent=1 // pred_check_branch
      %14 = sbr.rel (0) target = $region5
    $region4: #{tpu_custom_call.1} parent=1 // pred_region
      _
    $region5: #{tpu_custom_call.1} parent=1 // pred_fallthru
      _
    // Predicated region
    $region6: #{tpu_custom_call.1} parent=1 // pred_check
      _
    $region7: #{tpu_custom_call.1} parent=1 // pred_check_branch
      %16 = sbr.rel (0) target = $region9
    $region8: #{tpu_custom_call.1} parent=1 // pred_region
      %s18 = ssub.s32 128, 128
      %19 = vsyncadd [#allocation3], %s18
      %s21 = sshll.u32 [#allocation2], 4
      %s22 = int_to_ptr.vmem [resolvable:$true] %s21
      %24 = dma.hbm_to_vmem [thread:$0]  %s1, 128, %s22, [#allocation3]
    $region9: #{tpu_custom_call.1} parent=1 // pred_fallthru
      _
    // Predicated region
    $region10: #{tpu_custom_call.1} parent=1 // pred_check
      _
    $region11: #{tpu_custom_call.1} parent=1 // pred_check_branch
      %26 = sbr.rel (0) target = $region13
    $region12: #{tpu_custom_call.1} parent=1 // pred_region
      _
    $region13: #{tpu_custom_call.1} parent=1 // pred_fallthru
      _
    // Predicated region
    $region14: #{tpu_custom_call.1} parent=1 // pred_check
      _
    $region15: #{tpu_custom_call.1} parent=1 // pred_check_branch
      %28 = sbr.rel (0) target = $region17
    $region16: #{tpu_custom_call.1} parent=1 // pred_region
      _
    $region17: #{tpu_custom_call.1} parent=1 // pred_fallthru
      _
    // Predicated region
    $region18: #{tpu_custom_call.1} parent=1 // pred_check
      _
    $region19: #{tpu_custom_call.1} parent=1 // pred_check_branch
      %30 = sbr.rel (0) target = $region21
    $region20: #{tpu_custom_call.1} parent=1 // pred_region
      _
    $region21: #{tpu_custom_call.1} parent=1 // pred_fallthru
      _
    // Predicated region
    $region22: #{tpu_custom_call.1} parent=1 // pred_check
      _
    $region23: #{tpu_custom_call.1} parent=1 // pred_check_branch
      %32 = sbr.rel (0) target = $region25
    $region24: #{tpu_custom_call.1} parent=1 // pred_region
      _
    $region25: #{tpu_custom_call.1} parent=1 // pred_fallthru
      _
    // Predicated region
    $region26: #{tpu_custom_call.1} parent=1 // pred_check
      _
    $region27: #{tpu_custom_call.1} parent=1 // pred_check_branch
      %34 = sbr.rel (0) target = $region29
    $region28: #{tpu_custom_call.1} parent=1 // pred_region
      _
    $region29: #{tpu_custom_call.1} parent=1 // pred_fallthru
      _
    // Predicated region
    $region30: #{tpu_custom_call.1} parent=1 // pred_check
      _
    $region31: #{tpu_custom_call.1} parent=1 // pred_check_branch
      %36 = sbr.rel (0) target = $region33
    $region32: #{tpu_custom_call.1} parent=1 // pred_region
      %37 = dma.done [#allocation3], 128
    $region33: #{tpu_custom_call.1} parent=1 // pred_fallthru
      _
    %v38 = vld [vmem:[%s0] sm:$0xff]
    %v39 = vld [vmem:[#allocation2] sm:$0xff]
    %v40 = vld [vmem:[%s2] sm:$0x1]
    %v42 = vlaneseq
    %v43 = vshrl.u32 %v42, 7
    %v44 = vsub.s32 0, %v43
    %v45 = vrot.slane %v40, %v44
    %vm47 = vcmask 64512
    %v49 = vsel %vm47, %v38, 0
    %51 = vmatprep.subr.mxu0 0.0
    %52 = vmatpush1.msra.mxu0 %v39
    %53 = vmatprep.subr.mxu0 0.0
    %54 = vmatpush1.msra.mxu0 0.0
    %55 = vmatprep.subr.mxu0 0.0
    %56 = vmatpush1.msra.mxu0 0.0
    %57 = vmatprep.subr.mxu0 0.0
    %58 = vmatpush1.msra.mxu0 0.0
    %59 = vmatprep.subr.mxu0 0.0
    %60 = vmatpush1.msra.mxu0 0.0
    %61 = vmatprep.subr.mxu0 0.0
    %62 = vmatpush1.msra.mxu0 0.0
    %63 = vmatprep.subr.mxu0 0.0
    %64 = vmatpush1.msra.mxu0 0.0
    %65 = vmatprep.subr.mxu0 0.0
    %66 = vmatpush1.msra.mxu0 0.0
    %67 = vmatprep.subr.mxu0 0.0
    %68 = vmatpush1.msra.mxu0 0.0
    %69 = vmatprep.subr.mxu0 0.0
    %70 = vmatpush1.msra.mxu0 0.0
    %71 = vmatprep.subr.mxu0 0.0
    %72 = vmatpush1.msra.mxu0 0.0
    %73 = vmatprep.subr.mxu0 0.0
    %74 = vmatpush1.msra.mxu0 0.0
    %75 = vmatprep.subr.mxu0 0.0
    %76 = vmatpush1.msra.mxu0 0.0
    %77 = vmatprep.subr.mxu0 0.0
    %78 = vmatpush1.msra.mxu0 0.0
    %79 = vmatprep.subr.mxu0 0.0
    %80 = vmatpush1.msra.mxu0 0.0
    %81 = vmatprep.subr.mxu0 0.0
    %82 = vmatpush1.msra.mxu0 0.0
    %83 = vmatprep.subr.mxu0 0.0
    %84 = vmatpush1.msra.mxu0 0.0
    %85 = vmatprep.subr.mxu0 0.0
    %86 = vmatpush1.msra.mxu0 0.0
    %87 = vmatprep.subr.mxu0 0.0
    %88 = vmatpush1.msra.mxu0 0.0
    %89 = vmatprep.subr.mxu0 0.0
    %90 = vmatpush1.msra.mxu0 0.0
    %91 = vmatprep.subr.mxu0 0.0
    %92 = vmatpush1.msra.mxu0 0.0
    %93 = vmatprep.subr.mxu0 0.0
    %94 = vmatpush1.msra.mxu0 0.0
    %95 = vmatprep.subr.mxu0 0.0
    %96 = vmatpush1.msra.mxu0 0.0
    %97 = vmatprep.subr.mxu0 0.0
    %98 = vmatpush1.msra.mxu0 0.0
    %99 = vmatprep.subr.mxu0 0.0
    %100 = vmatpush1.msra.mxu0 0.0
    %101 = vmatprep.subr.mxu0 0.0
    %102 = vmatpush1.msra.mxu0 0.0
    %103 = vmatprep.subr.mxu0 0.0
    %104 = vmatpush1.msra.mxu0 0.0
    %105 = vmatprep.subr.mxu0 0.0
    %106 = vmatpush1.msra.mxu0 0.0
    %107 = vmatprep.subr.mxu0 0.0
    %108 = vmatpush1.msra.mxu0 0.0
    %109 = vmatprep.subr.mxu0 0.0
    %110 = vmatpush1.msra.mxu0 0.0
    %111 = vmatprep.subr.mxu0 0.0
    %112 = vmatpush1.msra.mxu0 0.0
    %113 = vmatprep.subr.mxu0 0.0
    %114 = vmatpush1.msra.mxu0 0.0
    %115 = vmatprep.mubr.f32.mxu0 0.0
    %116 = vmatmul.mubr.f32.gmra.mrb[0].mxu0 %v49
    %v117 = vpop.f32.mrb[0].mxu0
    %v118 = vadd.f32 %v45, %v117
    %v119 = vpop.f32.mrb[0].mxu0
    %120 = vdwg.mxu0
    %v121 = vmax.f32 %v118, 0.0
    %v122 = vld [vmem:[%s3] sm:$0xff]
    %v123 = vld [vmem:[%s3 + $0x8] sm:$0xff]
    %v124 = vld [vmem:[%s3 + $0x10] sm:$0xff]
    %v125 = vld [vmem:[%s3 + $0x18] sm:$0xff]
    %v126 = vld [vmem:[%s3 + $0x20] sm:$0xff]
    %v127 = vld [vmem:[%s3 + $0x28] sm:$0xff]
    %v128 = vld [vmem:[%s3 + $0x30] sm:$0xff]
    %v129 = vld [vmem:[%s3 + $0x38] sm:$0xff]
    %v130 = vld [vmem:[%s3 + $0x40] sm:$0xff]
    %v131 = vld [vmem:[%s3 + $0x48] sm:$0xff]
    %v132 = vld [vmem:[%s3 + $0x50] sm:$0xff]
    %v133 = vld [vmem:[%s3 + $0x58] sm:$0xff]
    %v134 = vld [vmem:[%s3 + $0x60] sm:$0xff]
    %v135 = vld [vmem:[%s3 + $0x68] sm:$0xff]
    %v136 = vld [vmem:[%s3 + $0x70] sm:$0xff]
    %v137 = vld [vmem:[%s3 + $0x78] sm:$0xff]
    %v138 = vld [vmem:[%s4] sm:$0x1]
    %v140 = vlaneseq
    %v141 = vshrl.u32 %v140, 7
    %v142 = vsub.s32 0, %v141
    %v143 = vrot.slane %v138, %v142
    %145 = vmatprep.subr.mxu0 0.0
    %146 = vmatpush1.msra.mxu0 %v122
    %147 = vmatprep.subr.mxu0 0.0
    %148 = vmatpush1.msra.mxu0 %v123
    %149 = vmatprep.subr.mxu0 0.0
    %150 = vmatpush1.msra.mxu0 %v124
    %151 = vmatprep.subr.mxu0 0.0
    %152 = vmatpush1.msra.mxu0 %v125
    %153 = vmatprep.subr.mxu0 0.0
    %154 = vmatpush1.msra.mxu0 %v126
    %155 = vmatprep.subr.mxu0 0.0
    %156 = vmatpush1.msra.mxu0 %v127
    %157 = vmatprep.subr.mxu0 0.0
    %158 = vmatpush1.msra.mxu0 %v128
    %159 = vmatprep.subr.mxu0 0.0
    %160 = vmatpush1.msra.mxu0 %v129
    %161 = vmatprep.subr.mxu0 0.0
    %162 = vmatpush1.msra.mxu0 %v130
    %163 = vmatprep.subr.mxu0 0.0
    %164 = vmatpush1.msra.mxu0 %v131
    %165 = vmatprep.subr.mxu0 0.0
    %166 = vmatpush1.msra.mxu0 %v132
    %167 = vmatprep.subr.mxu0 0.0
    %168 = vmatpush1.msra.mxu0 %v133
    %169 = vmatprep.subr.mxu0 0.0
    %170 = vmatpush1.msra.mxu0 %v134
    %171 = vmatprep.subr.mxu0 0.0
    %172 = vmatpush1.msra.mxu0 %v135
    %173 = vmatprep.subr.mxu0 0.0
    %174 = vmatpush1.msra.mxu0 %v136
    %175 = vmatprep.subr.mxu0 0.0
    %176 = vmatpush1.msra.mxu0 %v137
    %177 = vmatprep.subr.mxu0 0.0
    %178 = vmatpush1.msra.mxu0 0.0
    %179 = vmatprep.subr.mxu0 0.0
    %180 = vmatpush1.msra.mxu0 0.0
    %181 = vmatprep.subr.mxu0 0.0
    %182 = vmatpush1.msra.mxu0 0.0
    %183 = vmatprep.subr.mxu0 0.0
    %184 = vmatpush1.msra.mxu0 0.0
    %185 = vmatprep.subr.mxu0 0.0
    %186 = vmatpush1.msra.mxu0 0.0
    %187 = vmatprep.subr.mxu0 0.0
    %188 = vmatpush1.msra.mxu0 0.0
    %189 = vmatprep.subr.mxu0 0.0
    %190 = vmatpush1.msra.mxu0 0.0
    %191 = vmatprep.subr.mxu0 0.0
    %192 = vmatpush1.msra.mxu0 0.0
    %193 = vmatprep.subr.mxu0 0.0
    %194 = vmatpush1.msra.mxu0 0.0
    %195 = vmatprep.subr.mxu0 0.0
    %196 = vmatpush1.msra.mxu0 0.0
    %197 = vmatprep.subr.mxu0 0.0
    %198 = vmatpush1.msra.mxu0 0.0
    %199 = vmatprep.subr.mxu0 0.0
    %200 = vmatpush1.msra.mxu0 0.0
    %201 = vmatprep.subr.mxu0 0.0
    %202 = vmatpush1.msra.mxu0 0.0
    %203 = vmatprep.subr.mxu0 0.0
    %204 = vmatpush1.msra.mxu0 0.0
    %205 = vmatprep.subr.mxu0 0.0
    %206 = vmatpush1.msra.mxu0 0.0
    %207 = vmatprep.subr.mxu0 0.0
    %208 = vmatpush1.msra.mxu0 0.0
    %209 = vmatprep.mubr.f32.mxu0 0.0
    %210 = vmatmul.mubr.f32.gmra.mrb[0].mxu0 %v121
    %v211 = vpop.f32.mrb[0].mxu0
    %v212 = vadd.f32 %v143, %v211
    %v213 = vpop.f32.mrb[0].mxu0
    %214 = vdwg.mxu0
    %v215 = vmax.f32 %v212, 0.0
    %v216 = vld [vmem:[%s5] sm:$0xff]
    %v217 = vld [vmem:[%s5 + $0x8] sm:$0xff]
    %v218 = vld [vmem:[%s5 + $0x10] sm:$0xff]
    %v219 = vld [vmem:[%s5 + $0x18] sm:$0xff]
    %v220 = vld [vmem:[%s5 + $0x20] sm:$0xff]
    %v221 = vld [vmem:[%s5 + $0x28] sm:$0xff]
    %v222 = vld [vmem:[%s5 + $0x30] sm:$0xff]
    %v223 = vld [vmem:[%s5 + $0x38] sm:$0xff]
    %v224 = vld [vmem:[%s5 + $0x40] sm:$0xff]
    %v225 = vld [vmem:[%s5 + $0x48] sm:$0xff]
    %v226 = vld [vmem:[%s5 + $0x50] sm:$0xff]
    %v227 = vld [vmem:[%s5 + $0x58] sm:$0xff]
    %v228 = vld [vmem:[%s5 + $0x60] sm:$0xff]
    %v229 = vld [vmem:[%s5 + $0x68] sm:$0xff]
    %v230 = vld [vmem:[%s5 + $0x70] sm:$0xff]
    %v231 = vld [vmem:[%s5 + $0x78] sm:$0xff]
    %v232 = vld [vmem:[%s6] sm:$0x1]
    %v234 = vlaneseq
    %v235 = vshrl.u32 %v234, 7
    %v236 = vsub.s32 0, %v235
    %v237 = vrot.slane %v232, %v236
    %239 = vmatprep.subr.mxu0 0.0
    %240 = vmatpush1.msra.mxu0 %v216
    %241 = vmatprep.subr.mxu0 0.0
    %242 = vmatpush1.msra.mxu0 %v217
    %243 = vmatprep.subr.mxu0 0.0
    %244 = vmatpush1.msra.mxu0 %v218
    %245 = vmatprep.subr.mxu0 0.0
    %246 = vmatpush1.msra.mxu0 %v219
    %247 = vmatprep.subr.mxu0 0.0
    %248 = vmatpush1.msra.mxu0 %v220
    %249 = vmatprep.subr.mxu0 0.0
    %250 = vmatpush1.msra.mxu0 %v221
    %251 = vmatprep.subr.mxu0 0.0
    %252 = vmatpush1.msra.mxu0 %v222
    %253 = vmatprep.subr.mxu0 0.0
    %254 = vmatpush1.msra.mxu0 %v223
    %255 = vmatprep.subr.mxu0 0.0
    %256 = vmatpush1.msra.mxu0 %v224
    %257 = vmatprep.subr.mxu0 0.0
    %258 = vmatpush1.msra.mxu0 %v225
    %259 = vmatprep.subr.mxu0 0.0
    %260 = vmatpush1.msra.mxu0 %v226
    %261 = vmatprep.subr.mxu0 0.0
    %262 = vmatpush1.msra.mxu0 %v227
    %263 = vmatprep.subr.mxu0 0.0
    %264 = vmatpush1.msra.mxu0 %v228
    %265 = vmatprep.subr.mxu0 0.0
    %266 = vmatpush1.msra.mxu0 %v229
    %267 = vmatprep.subr.mxu0 0.0
    %268 = vmatpush1.msra.mxu0 %v230
    %269 = vmatprep.subr.mxu0 0.0
    %270 = vmatpush1.msra.mxu0 %v231
    %271 = vmatprep.subr.mxu0 0.0
    %272 = vmatpush1.msra.mxu0 0.0
    %273 = vmatprep.subr.mxu0 0.0
    %274 = vmatpush1.msra.mxu0 0.0
    %275 = vmatprep.subr.mxu0 0.0
    %276 = vmatpush1.msra.mxu0 0.0
    %277 = vmatprep.subr.mxu0 0.0
    %278 = vmatpush1.msra.mxu0 0.0
    %279 = vmatprep.subr.mxu0 0.0
    %280 = vmatpush1.msra.mxu0 0.0
    %281 = vmatprep.subr.mxu0 0.0
    %282 = vmatpush1.msra.mxu0 0.0
    %283 = vmatprep.subr.mxu0 0.0
    %284 = vmatpush1.msra.mxu0 0.0
    %285 = vmatprep.subr.mxu0 0.0
    %286 = vmatpush1.msra.mxu0 0.0
    %287 = vmatprep.subr.mxu0 0.0
    %288 = vmatpush1.msra.mxu0 0.0
    %289 = vmatprep.subr.mxu0 0.0
    %290 = vmatpush1.msra.mxu0 0.0
    %291 = vmatprep.subr.mxu0 0.0
    %292 = vmatpush1.msra.mxu0 0.0
    %293 = vmatprep.subr.mxu0 0.0
    %294 = vmatpush1.msra.mxu0 0.0
    %295 = vmatprep.subr.mxu0 0.0
    %296 = vmatpush1.msra.mxu0 0.0
    %297 = vmatprep.subr.mxu0 0.0
    %298 = vmatpush1.msra.mxu0 0.0
    %299 = vmatprep.subr.mxu0 0.0
    %300 = vmatpush1.msra.mxu0 0.0
    %301 = vmatprep.subr.mxu0 0.0
    %302 = vmatpush1.msra.mxu0 0.0
    %303 = vmatprep.mubr.f32.mxu0 0.0
    %304 = vmatmul.mubr.f32.gmra.mrb[0].mxu0 %v215
    %v305 = vpop.f32.mrb[0].mxu0
    %v306 = vadd.f32 %v237, %v305
    %v307 = vpop.f32.mrb[0].mxu0
    %308 = vdwg.mxu0
    %vm309 = vcmask 31744
    %310 = vst.msk [vmem:[%s7] sm:$0xff] %vm309, %v306
    // Predicated region
    $region34: #{tpu_custom_call.1} parent=1 // pred_check
      _
    $region35: #{tpu_custom_call.1} parent=1 // pred_check_branch
      %312 = sbr.rel (0) target = $region37
    $region36: #{tpu_custom_call.1} parent=1 // pred_region
      _
    $region37: #{tpu_custom_call.1} parent=1 // pred_fallthru
      _
    // Predicated region
    $region38: #{tpu_custom_call.1} parent=1 // pred_check
      _
    $region39: #{tpu_custom_call.1} parent=1 // pred_check_branch
      %314 = sbr.rel (0) target = $region41
    $region40: #{tpu_custom_call.1} parent=1 // pred_region
      _
    $region41: #{tpu_custom_call.1} parent=1 // pred_fallthru
      _
    %315 = vsyncpa [#allocation3], 1

</llo_original>
